<compile_context>
chip_gen: v7x
topology: tpu7x:2x2x1
jax: 0.10.0
libtpu: 0.0.40
codegen_flags: <defaults>
</compile_context>

<pallas_src>
import jax
import jax.numpy as jnp
from jax.experimental import pallas as pl
from jax.experimental.pallas import tpu as pltpu


def _make_sepconv_kernel(k: int, residual: bool, norm: bool, eps: float):
    pad = k // 2

    def kernel(*refs):
        if norm:
            x_ref, dw_w_ref, pw_wt_ref, bias_ref, a2_ref, b2_ref, o_ref = refs
        else:
            x_ref, dw_w_ref, pw_wt_ref, bias_ref, o_ref = refs

        L, H = o_ref.shape

        x = x_ref[...].astype(jnp.float32)          # (L, H), H on lanes
        dw_w = dw_w_ref[...].astype(jnp.float32)    # (k, H)

        # ---- depthwise conv along the sequence axis (static-unrolled taps) ----
        acc = jnp.zeros((L, H), jnp.float32)
        for j in range(k):
            d = j - pad  # tap offset: out[l] += w[j] * x[l + d] (zero padded)
            if d < 0:
                shifted = jnp.concatenate(
                    [jnp.zeros((-d, H), jnp.float32), x[: L + d, :]], axis=0)
            elif d > 0:
                shifted = jnp.concatenate(
                    [x[d:, :], jnp.zeros((d, H), jnp.float32)], axis=0)
            else:
                shifted = x
            acc = acc + shifted * dw_w[j:j + 1, :]

        # ---- pointwise (1x1) conv == MXU matmul, fused bias (dw + pw) ----
        y = jnp.dot(acc, pw_wt_ref[...].astype(jnp.float32),
                    preferred_element_type=jnp.float32)
        y = y + bias_ref[...].astype(jnp.float32)

        if residual:
            y = x + y

        if norm:
            # LayerNorm with torch semantics: unbiased std, eps added to std.
            mean = jnp.mean(y, axis=-1, keepdims=True)
            centered = y - mean
            std = jnp.sqrt(
                jnp.sum(centered * centered, axis=-1, keepdims=True) / (H - 1))
            y = (a2_ref[...].astype(jnp.float32) * centered / (std + eps)
                 + b2_ref[...].astype(jnp.float32))

        o_ref[...] = y.astype(o_ref.dtype)

    return kernel


def sepconv_forward(x, dw_weight, dw_bias, pw_weight, pw_bias, *,
                    k=3, residual=False, norm=False,
                    ln_weight=None, ln_bias=None, eps=1e-6):
    """Pallas SepConv.forward (inference mode).

    Args:
      x:         (B, L, H)  sequence-major activations (H == __C.HSIZE)
      dw_weight: (H, 1, k)  torch Conv1d depthwise weight layout
      dw_bias:   (H,)
      pw_weight: (H, H, 1)  torch Conv1d pointwise weight layout
      pw_bias:   (H,)
    """
    B, L, H = x.shape
    if norm and (ln_weight is None or ln_bias is None):
        raise ValueError("norm=True requires ln_weight and ln_bias")

    # Wrapper-side layout plumbing (cheap, tiny tensors):
    #  - depthwise taps as (k, H) for per-lane broadcast inside the kernel
    #  - pointwise matrix transposed to (H_in, H_out) for a direct row-major matmul
    #  - depthwise bias folded into the pointwise bias: pw(dw_out + b_dw)
    #    = pw(dw_out) + (W_pw @ b_dw + b_pw)
    dw_w = jnp.transpose(dw_weight[:, 0, :], (1, 0)).astype(jnp.float32)   # (k, H)
    pw_w2d = pw_weight[:, :, 0].astype(jnp.float32)                        # (H_out, H_in)
    pw_wt = jnp.transpose(pw_w2d, (1, 0))                                  # (H_in, H_out)
    fused_b = (pw_bias.astype(jnp.float32)
               + jnp.dot(pw_w2d, dw_bias.astype(jnp.float32))).reshape(1, H)

    in_specs = [
        pl.BlockSpec((None, L, H), lambda b: (b, 0, 0)),   # x (per-batch block)
        pl.BlockSpec((k, H), lambda b: (0, 0)),            # depthwise taps (resident)
        pl.BlockSpec((H, H), lambda b: (0, 0)),            # pointwise matrix (resident)
        pl.BlockSpec((1, H), lambda b: (0, 0)),            # fused bias (resident)
    ]
    args = [x, dw_w, pw_wt, fused_b]
    if norm:
        in_specs += [pl.BlockSpec((1, H), lambda b: (0, 0)),
                     pl.BlockSpec((1, H), lambda b: (0, 0))]
        args += [ln_weight.reshape(1, H).astype(jnp.float32),
                 ln_bias.reshape(1, H).astype(jnp.float32)]

    itemsize = jnp.dtype(x.dtype).itemsize
    flops = 2 * B * L * H * (k + H)
    bytes_accessed = (2 * B * L * H) * itemsize + 4 * (k * H + H * H + H)

    return pl.pallas_call(
        _make_sepconv_kernel(k, residual, norm, eps),
        out_shape=jax.ShapeDtypeStruct((B, L, H), x.dtype),
        grid=(B,),
        in_specs=in_specs,
        out_specs=pl.BlockSpec((None, L, H), lambda b: (b, 0, 0)),
        compiler_params=pltpu.CompilerParams(
            dimension_semantics=("parallel",)),
        cost_estimate=pl.CostEstimate(
            flops=flops, transcendentals=0, bytes_accessed=bytes_accessed),
    )(*args)


def _reference(x, dw_weight, dw_bias, pw_weight, pw_bias, *, k=3,
               residual=False, norm=False, ln_weight=None, ln_bias=None,
               eps=1e-6):
    """Pure-JAX reference of SepConv.forward (inference)."""
    B, L, H = x.shape
    pad = k // 2
    xp = jnp.pad(x.astype(jnp.float32), ((0, 0), (pad, pad), (0, 0)))
    dw = jnp.zeros((B, L, H), jnp.float32)
    for j in range(k):
        dw = dw + xp[:, j:j + L, :] * dw_weight[:, 0, j][None, None, :]
    dw = dw + dw_bias[None, None, :]
    y = jnp.einsum("blh,oh->blo", dw, pw_weight[:, :, 0].astype(jnp.float32))
    y = y + pw_bias[None, None, :]
    if residual:
        y = x.astype(jnp.float32) + y
    if norm:
        mean = jnp.mean(y, axis=-1, keepdims=True)
        c = y - mean
        std = jnp.sqrt(jnp.sum(c * c, axis=-1, keepdims=True) / (H - 1))
        y = ln_weight * c / (std + eps) + ln_bias
    return y.astype(x.dtype)


if __name__ == "__main__":
    key = jax.random.PRNGKey(0)
    B, L, H, K = 2, 8, 32, 3
    ks = jax.random.split(key, 5)

    x = jax.random.normal(ks[0], (B, L, H), dtype=jnp.float32)
    dw_weight = jax.random.normal(ks[1], (H, 1, K), dtype=jnp.float32) * (2.0 / K) ** 0.5
    dw_bias = jax.random.normal(ks[2], (H,), dtype=jnp.float32) * 0.1
    pw_weight = jax.random.normal(ks[3], (H, H, 1), dtype=jnp.float32) * (2.0 / H) ** 0.5
    pw_bias = jax.random.normal(ks[4], (H,), dtype=jnp.float32) * 0.1
    ln_w = jnp.ones((H,), jnp.float32)
    ln_b = jnp.zeros((H,), jnp.float32)

    # Default SepConv config: residual=False, norm=False (dropout = identity).
    out = sepconv_forward(x, dw_weight, dw_bias, pw_weight, pw_bias, k=K)
    out = jax.block_until_ready(out)
    ref = _reference(x, dw_weight, dw_bias, pw_weight, pw_bias, k=K)
    assert out.shape == x.shape, f"shape mismatch: {out.shape} vs {x.shape}"
    assert out.dtype == x.dtype, f"dtype mismatch: {out.dtype} vs {x.dtype}"
    err = float(jnp.max(jnp.abs(out - ref)))
    assert jnp.allclose(out, ref, rtol=1e-4, atol=1e-4), f"max abs err {err}"

    # residual + LayerNorm variant (SepConv(norm=True, residual=True)).
    out2 = sepconv_forward(x, dw_weight, dw_bias, pw_weight, pw_bias, k=K,
                           residual=True, norm=True,
                           ln_weight=ln_w, ln_bias=ln_b, eps=1e-6)
    out2 = jax.block_until_ready(out2)
    ref2 = _reference(x, dw_weight, dw_bias, pw_weight, pw_bias, k=K,
                      residual=True, norm=True,
                      ln_weight=ln_w, ln_bias=ln_b, eps=1e-6)
    err2 = float(jnp.max(jnp.abs(out2 - ref2)))
    assert jnp.allclose(out2, ref2, rtol=1e-4, atol=1e-4), f"max abs err {err2}"

    print("KERNEL_OK")
</pallas_src>

<mosaic_0001>
module attributes {stable_mosaic.version = 11 : i64} {
  func.func @kernel(%arg0: i32, %arg1: memref<1x8x32xf32, #tpu.memory_space<vmem>>, %arg2: memref<3x32xf32, #tpu.memory_space<vmem>>, %arg3: memref<32x32xf32, #tpu.memory_space<vmem>>, %arg4: memref<1x32xf32, #tpu.memory_space<vmem>>, %arg5: memref<1x8x32xf32, #tpu.memory_space<vmem>>) attributes {dimension_semantics = [#tpu.dimension_semantics<parallel>], iteration_bounds = array<i64: 2>, scalar_prefetch = 0 : i64, scratch_operands = 0 : i64, tpu.core_type = #tpu.core_type<tc>, window_params = [{transform_indices = @transform_0, window_bounds = array<i64: 1, 8, 32>}, {pipeline_mode = #tpu.pipeline_mode<synchronous>, transform_indices = @transform_1, window_bounds = array<i64: 3, 32>}, {pipeline_mode = #tpu.pipeline_mode<synchronous>, transform_indices = @transform_2, window_bounds = array<i64: 32, 32>}, {pipeline_mode = #tpu.pipeline_mode<synchronous>, transform_indices = @transform_3, window_bounds = array<i64: 1, 32>}, {transform_indices = @transform_4, window_bounds = array<i64: 1, 8, 32>}]} {
    %c0 = arith.constant 0 : index
    %c0_0 = arith.constant 0 : index
    %c0_1 = arith.constant 0 : index
    %0 = vector.load %arg1[%c0, %c0_0, %c0_1] : memref<1x8x32xf32, #tpu.memory_space<vmem>>, vector<1x8x32xf32>
    %1 = vector.shape_cast %0 : vector<1x8x32xf32> to vector<8x32xf32>
    %c0_2 = arith.constant 0 : index
    %c0_3 = arith.constant 0 : index
    %2 = vector.load %arg2[%c0_2, %c0_3] : memref<3x32xf32, #tpu.memory_space<vmem>>, vector<3x32xf32>
    %cst = arith.constant 0.000000e+00 : f32
    %3 = vector.broadcast %cst : f32 to vector<8x32xf32>
    %cst_4 = arith.constant 0.000000e+00 : f32
    %4 = vector.broadcast %cst_4 : f32 to vector<1x32xf32>
    %5 = vector.extract_strided_slice %1 {offsets = [0, 0], sizes = [7, 32], strides = [1, 1]} : vector<8x32xf32> to vector<7x32xf32>
    %6 = tpu.concatenate %4, %5 in 0 : vector<1x32xf32>, vector<7x32xf32> -> vector<8x32xf32>
    %7 = vector.extract_strided_slice %2 {offsets = [0, 0], sizes = [1, 32], strides = [1, 1]} : vector<3x32xf32> to vector<1x32xf32>
    %8 = vector.broadcast %7 : vector<1x32xf32> to vector<8x32xf32>
    %9 = arith.mulf %6, %8 : vector<8x32xf32>
    %10 = arith.addf %3, %9 : vector<8x32xf32>
    %11 = vector.extract_strided_slice %2 {offsets = [1, 0], sizes = [1, 32], strides = [1, 1]} : vector<3x32xf32> to vector<1x32xf32>
    %12 = vector.broadcast %11 : vector<1x32xf32> to vector<8x32xf32>
    %13 = arith.mulf %1, %12 : vector<8x32xf32>
    %14 = arith.addf %10, %13 : vector<8x32xf32>
    %15 = vector.extract_strided_slice %1 {offsets = [1, 0], sizes = [7, 32], strides = [1, 1]} : vector<8x32xf32> to vector<7x32xf32>
    %cst_5 = arith.constant 0.000000e+00 : f32
    %16 = vector.broadcast %cst_5 : f32 to vector<1x32xf32>
    %17 = tpu.concatenate %15, %16 in 0 : vector<7x32xf32>, vector<1x32xf32> -> vector<8x32xf32>
    %18 = vector.extract_strided_slice %2 {offsets = [2, 0], sizes = [1, 32], strides = [1, 1]} : vector<3x32xf32> to vector<1x32xf32>
    %19 = vector.broadcast %18 : vector<1x32xf32> to vector<8x32xf32>
    %20 = arith.mulf %17, %19 : vector<8x32xf32>
    %21 = arith.addf %14, %20 : vector<8x32xf32>
    %c0_6 = arith.constant 0 : index
    %c0_7 = arith.constant 0 : index
    %22 = vector.load %arg3[%c0_6, %c0_7] : memref<32x32xf32, #tpu.memory_space<vmem>>, vector<32x32xf32>
    %cst_8 = arith.constant dense<0.000000e+00> : vector<8x32xf32>
    %23 = tpu.matmul %21, %22, %cst_8 {dimension_numbers = #tpu.dot_dimension_numbers<[1], [0], [0], [1], [0, 0, 1, 1], [], []>} : vector<8x32xf32>, vector<32x32xf32>, vector<8x32xf32> -> vector<8x32xf32>
    %c0_9 = arith.constant 0 : index
    %c0_10 = arith.constant 0 : index
    %24 = vector.load %arg4[%c0_9, %c0_10] : memref<1x32xf32, #tpu.memory_space<vmem>>, vector<1x32xf32>
    %25 = vector.broadcast %24 : vector<1x32xf32> to vector<8x32xf32>
    %26 = arith.addf %23, %25 : vector<8x32xf32>
    %c0_11 = arith.constant 0 : index
    %c0_12 = arith.constant 0 : index
    %c0_13 = arith.constant 0 : index
    %27 = vector.load %arg5[%c0_11, %c0_12, %c0_13] : memref<1x8x32xf32, #tpu.memory_space<vmem>>, vector<1x8x32xf32>
    %28 = vector.shape_cast %27 : vector<1x8x32xf32> to vector<8x32xf32>
    %29 = vector.shape_cast %26 : vector<8x32xf32> to vector<1x8x32xf32>
    tpu.vector_store %arg5[%c0_11, %c0_12, %c0_13], %29 {strides = array<i32>} : memref<1x8x32xf32, #tpu.memory_space<vmem>>, vector<1x8x32xf32>,
    return
  }
  func.func @transform_0(%arg0: i32) -> (i32, i32, i32) {
    %c0_i32 = arith.constant 0 : i32
    %c0_i32_0 = arith.constant 0 : i32
    %c0_i32_1 = arith.constant 0 : i32
    return %arg0, %c0_i32, %c0_i32_0 : i32, i32, i32
  }
  func.func @transform_1(%arg0: i32) -> (i32, i32) {
    %c0_i32 = arith.constant 0 : i32
    %c0_i32_0 = arith.constant 0 : i32
    %c0_i32_1 = arith.constant 0 : i32
    return %c0_i32, %c0_i32_0 : i32, i32
  }
  func.func @transform_2(%arg0: i32) -> (i32, i32) {
    %c0_i32 = arith.constant 0 : i32
    %c0_i32_0 = arith.constant 0 : i32
    %c0_i32_1 = arith.constant 0 : i32
    return %c0_i32, %c0_i32_0 : i32, i32
  }
  func.func @transform_3(%arg0: i32) -> (i32, i32) {
    %c0_i32 = arith.constant 0 : i32
    %c0_i32_0 = arith.constant 0 : i32
    %c0_i32_1 = arith.constant 0 : i32
    return %c0_i32, %c0_i32_0 : i32, i32
  }
  func.func @transform_4(%arg0: i32) -> (i32, i32, i32) {
    %c0_i32 = arith.constant 0 : i32
    %c0_i32_0 = arith.constant 0 : i32
    %c0_i32_1 = arith.constant 0 : i32
    return %arg0, %c0_i32, %c0_i32_0 : i32, i32, i32
  }
}

</mosaic_0001>

<llo_original>
// kernel: tpu_custom_call.1
$region0: #{tpu_custom_call.1}
  #allocation0 [shape = 'u32[]', space=smem, size = 0x4, offset = 0x4, fixed_abs, tag = 'smem constant byte address 0x4 - core index']
  #allocation1 [shape = 'u32[144,128]{1,0:T(1,128)}', space=vmem, size = 0x12000, scoped, tag = 'internal scratch']
  %s0 = inlined_call_operand.hbm [shape: f32[2,8,32], index: 0, kind: input, shape index: {}]
  %s1 = inlined_call_operand.hbm [shape: f32[3,32], index: 1, kind: input, shape index: {}]
  %s2 = inlined_call_operand.hbm [shape: f32[32,32], index: 2, kind: input, shape index: {}]
  %s3 = inlined_call_operand.vmem [shape: f32[1,32], index: 3, kind: input, shape index: {}]
  %s4 = inlined_call_operand.hbm [shape: f32[2,8,32], index: 4, kind: output, shape index: {}]
  %s5 = sld [smem:[#allocation0]]
  $region61: #{tpu_custom_call.1} parent=0
    _
  %s7 = ssub.s32 1, %s5
  %s8 = scalar_select 0, %s7, %s5
  $region1: #{tpu_custom_call.1} parent=0
    #allocation2 [shape = 'u8[8192]{0}', space=vmem, size = 0x2000, scoped, tag = 'input window, operand 0']
    #allocation3 [shape = 's32[2]{0}', space=sflag, size = 0x8, scoped, tag = 'scoped memory for tpu_custom_call.1']
    #allocation4 [shape = 's32[2]{0}', space=sflag, size = 0x8, scoped, tag = 'scoped memory for tpu_custom_call.1']
    #allocation5 [shape = 'u8[2048]{0}', space=vmem, size = 0x800, scoped, tag = 'input window, operand 1, single buffered']
    #allocation6 [shape = 's32[1]{0}', space=sflag, size = 0x4, scoped, tag = 'scoped memory for tpu_custom_call.1']
    #allocation7 [shape = 'u8[16384]{0}', space=vmem, size = 0x4000, scoped, tag = 'input window, operand 2, single buffered']
    #allocation8 [shape = 'u8[8192]{0}', space=vmem, size = 0x2000, scoped, tag = 'output window, operand 0']
    %9 = vsyncpa [#allocation3], 0
    %s10 = scalar_lea.sflag [#allocation3], 1
    %11 = vsyncpa %s10, 0
    %12 = vsyncpa [#allocation6], 0
    %13 = vsyncpa [#allocation4], 0
    %s14 = scalar_lea.sflag [#allocation4], 1
    %15 = vsyncpa %s14, 0
    loop: start=0, step=1, limit=4
    $region2: #{tpu_custom_call.1} parent=1 // loop_pre_header
      _
    $region3: #{tpu_custom_call.1} parent=1 // loop_header
      %s17 = sphi 0, %s21
      %p18 = scmp.ge.s32.totalorder %s17, 4
      %s27 = sphi 0, %s29
      %s30 = sphi 0, %s27
      %s31 = sphi 0, %s30
      %s47 = sphi 0, %s31
      %s51 = sphi 0, %s51
      %s53 = sphi 0, %s51
      %s54 = sphi 0, %s53
      %s68 = sphi 0, %s54
      %s72 = sphi 0, %s72
      %s74 = sphi 0, %s72
      %s75 = sphi 0, %s74
      %s89 = sphi 0, %s75
      %s93 = sphi 0, %s93
      %s95 = sphi 0, %s93
      %s96 = sphi 0, %s95
      %s110 = sphi 0, %s96
      %s116 = sphi 0, %s118
      %s119 = sphi 0, %s116
      %s120 = sphi 0, %s119
      %s136 = sphi 0, %s120
    $region4: #{tpu_custom_call.1} parent=1 // loop_header_branch
      %20 = sbr.rel (%p18) target = $region8
    $region5: #{tpu_custom_call.1} parent=1 // loop_body
      %s22 = ssub.s32 %s17, 1
      %s23 = ssub.s32 %s17, 2
      %s24 = sadd.s32 %s17, 1
      %s25 = ssub.s32 %s17, %s24
      %p26 = scmp.eq.s32.totalorder %s25, 0
      %s28 = sadd.s32 %s27, 1
      %s29 = scalar_select %p26, %s27, %s28
      %p32 = pneg %p26
      %p33 = scmp.eq.s32.totalorder %s17, 1
      %p34 = por %p32, %p33
      %p35 = scmp.ne.s32.totalorder %s27, %s30
      %p36 = scmp.eq.s32.totalorder %s17, 0
      %p37 = por %p35, %p36
      %p38 = scmp.ne.s32.totalorder %s27, %s30
      %p39 = scmp.eq.s32.totalorder %s22, 1
      %p40 = por %p38, %p39
      %p41 = scmp.ne.s32.totalorder %s30, %s31
      %p42 = scmp.eq.s32.totalorder %s22, 0
      %p43 = por %p41, %p42
      %p44 = scmp.ne.s32.totalorder %s30, %s31
      %p45 = scmp.eq.s32.totalorder %s23, 1
      %p46 = por %p44, %p45
      %p48 = scmp.ne.s32.totalorder %s31, %s47
      %p49 = scmp.eq.s32.totalorder %s23, 0
      %p50 = por %p48, %p49
      %s52 = sadd.s32 %s51, 1
      %p55 = scmp.eq.s32.totalorder %s17, 1
      %p56 = scmp.ne.s32.totalorder %s51, %s53
      %p57 = scmp.eq.s32.totalorder %s17, 0
      %p58 = por %p56, %p57
      %p59 = scmp.ne.s32.totalorder %s51, %s53
      %p60 = scmp.eq.s32.totalorder %s22, 1
      %p61 = por %p59, %p60
      %p62 = scmp.ne.s32.totalorder %s53, %s54
      %p63 = scmp.eq.s32.totalorder %s22, 0
      %p64 = por %p62, %p63
      %p65 = scmp.ne.s32.totalorder %s53, %s54
      %p66 = scmp.eq.s32.totalorder %s23, 1
      %p67 = por %p65, %p66
      %p69 = scmp.ne.s32.totalorder %s54, %s68
      %p70 = scmp.eq.s32.totalorder %s23, 0
      %p71 = por %p69, %p70
      %s73 = sadd.s32 %s72, 1
      %p76 = scmp.eq.s32.totalorder %s17, 1
      %p77 = scmp.ne.s32.totalorder %s72, %s74
      %p78 = scmp.eq.s32.totalorder %s17, 0
      %p79 = por %p77, %p78
      %p80 = scmp.ne.s32.totalorder %s72, %s74
      %p81 = scmp.eq.s32.totalorder %s22, 1
      %p82 = por %p80, %p81
      %p83 = scmp.ne.s32.totalorder %s74, %s75
      %p84 = scmp.eq.s32.totalorder %s22, 0
      %p85 = por %p83, %p84
      %p86 = scmp.ne.s32.totalorder %s74, %s75
      %p87 = scmp.eq.s32.totalorder %s23, 1
      %p88 = por %p86, %p87
      %p90 = scmp.ne.s32.totalorder %s75, %s89
      %p91 = scmp.eq.s32.totalorder %s23, 0
      %p92 = por %p90, %p91
      %s94 = sadd.s32 %s93, 1
      %p97 = scmp.eq.s32.totalorder %s17, 1
      %p98 = scmp.ne.s32.totalorder %s93, %s95
      %p99 = scmp.eq.s32.totalorder %s17, 0
      %p100 = por %p98, %p99
      %p101 = scmp.ne.s32.totalorder %s93, %s95
      %p102 = scmp.eq.s32.totalorder %s22, 1
      %p103 = por %p101, %p102
      %p104 = scmp.ne.s32.totalorder %s95, %s96
      %p105 = scmp.eq.s32.totalorder %s22, 0
      %p106 = por %p104, %p105
      %p107 = scmp.ne.s32.totalorder %s95, %s96
      %p108 = scmp.eq.s32.totalorder %s23, 1
      %p109 = por %p107, %p108
      %p111 = scmp.ne.s32.totalorder %s96, %s110
      %p112 = scmp.eq.s32.totalorder %s23, 0
      %p113 = por %p111, %p112
      %s114 = ssub.s32 %s17, %s24
      %p115 = scmp.eq.s32.totalorder %s114, 0
      %s117 = sadd.s32 %s116, 1
      %s118 = scalar_select %p115, %s116, %s117
      %p121 = pneg %p115
      %p122 = scmp.eq.s32.totalorder %s17, 1
      %p123 = por %p121, %p122
      %p124 = scmp.ne.s32.totalorder %s116, %s119
      %p125 = scmp.eq.s32.totalorder %s17, 0
      %p126 = por %p124, %p125
      %p127 = scmp.ne.s32.totalorder %s116, %s119
      %p128 = scmp.eq.s32.totalorder %s22, 1
      %p129 = por %p127, %p128
      %p130 = scmp.ne.s32.totalorder %s119, %s120
      %p131 = scmp.eq.s32.totalorder %s22, 0
      %p132 = por %p130, %p131
      %p133 = scmp.ne.s32.totalorder %s119, %s120
      %p134 = scmp.eq.s32.totalorder %s23, 1
      %p135 = por %p133, %p134
      %p137 = scmp.ne.s32.totalorder %s120, %s136
      %p138 = scmp.eq.s32.totalorder %s23, 0
      %p139 = por %p137, %p138
      %p140 = scmp.le.s32.totalorder 1, %s17
      %p141 = scmp.lt.s32.totalorder %s17, 3
      %p142 = pnand %p140, %p141
      %p143 = pneg %p142
      // Predicated region
      $region9: #{tpu_custom_call.1} parent=5 // pred_check
        _
      $region10: #{tpu_custom_call.1} parent=5 // pred_check_branch
        %145 = sbr.rel (%p142) target = $region12
      $region11: #{tpu_custom_call.1} parent=5 // pred_region
        %s146 = ssub.s32 %s17, 1
        // Predicated region
        $region13: #{tpu_custom_call.1} parent=11 // pred_check
          %p147 = pneg %p64
        $region14: #{tpu_custom_call.1} parent=11 // pred_check_branch
          %149 = sbr.rel (%p147) target = $region16
        $region15: #{tpu_custom_call.1} parent=11 // pred_region
          %s151 = ssub.s32 64, 64
          %152 = vsyncadd [#allocation6], %s151
          %s154 = sshll.u32 [#allocation5], 4
          %s155 = int_to_ptr.vmem [resolvable:$true] %s154
          %157 = dma.hbm_to_vmem [thread:$0]  %s1, 64, %s155, [#allocation6]
        $region16: #{tpu_custom_call.1} parent=11 // pred_fallthru
          _
        // Predicated region
        $region17: #{tpu_custom_call.1} parent=11 // pred_check
          %p158 = pneg %p85
        $region18: #{tpu_custom_call.1} parent=11 // pred_check_branch
          %160 = sbr.rel (%p158) target = $region20
        $region19: #{tpu_custom_call.1} parent=11 // pred_region
          %s162 = ssub.s32 512, 512
          %163 = vsyncadd [#allocation6], %s162
          %s164 = sshll.u32 [#allocation7], 4
          %s165 = int_to_ptr.vmem [resolvable:$true] %s164
          %170 = dma.hbm_to_vmem [thread:$0]  %s2, 512, %s165, [#allocation6], 128, 128, 8
        $region20: #{tpu_custom_call.1} parent=11 // pred_fallthru
          _
        // Predicated region
        $region21: #{tpu_custom_call.1} parent=11 // pred_check
          %p171 = pneg %p106
        $region22: #{tpu_custom_call.1} parent=11 // pred_check_branch
          %173 = sbr.rel (%p171) target = $region24
        $region23: #{tpu_custom_call.1} parent=11 // pred_region
          _
        $region24: #{tpu_custom_call.1} parent=11 // pred_fallthru
          _
      $region12: #{tpu_custom_call.1} parent=5 // pred_fallthru
        _
      %p174 = scmp.lt.s32.totalorder %s17, 2
      // Predicated region
      $region25: #{tpu_custom_call.1} parent=5 // pred_check
        %p175 = pneg %p174
      $region26: #{tpu_custom_call.1} parent=5 // pred_check_branch
        %177 = sbr.rel (%p175) target = $region28
      $region27: #{tpu_custom_call.1} parent=5 // pred_region
        // Predicated region
        $region29: #{tpu_custom_call.1} parent=27 // pred_check
          %p178 = pneg %p37
        $region30: #{tpu_custom_call.1} parent=27 // pred_check_branch
          %180 = sbr.rel (%p178) target = $region32
        $region31: #{tpu_custom_call.1} parent=27 // pred_region
          %s181 = sand.u32 %s27, 1
          %s182 = scalar_lea.sflag [#allocation3], %s181
          %s183 = sand.u32 %s27, 1
          %s184 = smul.addr %s183, 8
          %s185 = scalar_lea.vmem [#allocation2], %s184
          %s187 = ssub.s32 128, 128
          %188 = vsyncadd %s182, %s187
          %s189 = smul.addr %s17, 128
          %s190 = scalar_lea.hbm %s0, %s189
          %s192 = sshll.u32 %s185, 4
          %s193 = int_to_ptr.vmem [resolvable:$true] %s192
          %195 = dma.hbm_to_vmem [thread:$0]  %s190, 128, %s193, %s182
        $region32: #{tpu_custom_call.1} parent=27 // pred_fallthru
          _
      $region28: #{tpu_custom_call.1} parent=5 // pred_fallthru
        _
      %p196 = scmp.le.s32.totalorder 1, %s17
      %p197 = scmp.lt.s32.totalorder %s17, 3
      %p198 = pnand %p196, %p197
      %p199 = pneg %p198
      // Predicated region
      $region33: #{tpu_custom_call.1} parent=5 // pred_check
        _
      $region34: #{tpu_custom_call.1} parent=5 // pred_check_branch
        %201 = sbr.rel (%p198) target = $region36
      $region35: #{tpu_custom_call.1} parent=5 // pred_region
        %s202 = ssub.s32 %s17, 1
        %s203 = sand.u32 %s30, 1
        %s204 = scalar_lea.sflag [#allocation3], %s203
        %s205 = sand.u32 %s30, 1
        %s206 = smul.addr %s205, 8
        %s207 = scalar_lea.vmem [#allocation2], %s206
        // Predicated region
        $region37: #{tpu_custom_call.1} parent=35 // pred_check
          %p208 = pneg %p43
        $region38: #{tpu_custom_call.1} parent=35 // pred_check_branch
          %210 = sbr.rel (%p208) target = $region40
        $region39: #{tpu_custom_call.1} parent=35 // pred_region
          %211 = dma.done %s204, 128
        $region40: #{tpu_custom_call.1} parent=35 // pred_fallthru
          _
        // Predicated region
        $region41: #{tpu_custom_call.1} parent=35 // pred_check
          %p212 = pneg %p64
        $region42: #{tpu_custom_call.1} parent=35 // pred_check_branch
          %214 = sbr.rel (%p212) target = $region44
        $region43: #{tpu_custom_call.1} parent=35 // pred_region
          %215 = dma.done [#allocation6], 64
        $region44: #{tpu_custom_call.1} parent=35 // pred_fallthru
          _
        // Predicated region
        $region45: #{tpu_custom_call.1} parent=35 // pred_check
          %p216 = pneg %p85
        $region46: #{tpu_custom_call.1} parent=35 // pred_check_branch
          %218 = sbr.rel (%p216) target = $region48
        $region47: #{tpu_custom_call.1} parent=35 // pred_region
          %219 = dma.done [#allocation6], 512
        $region48: #{tpu_custom_call.1} parent=35 // pred_fallthru
          _
        %s220 = sand.u32 %s30, 1
        %s221 = scalar_lea.sflag [#allocation3], %s220
        %s222 = sand.u32 %s30, 1
        %s223 = smul.addr %s222, 8
        %s224 = scalar_lea.vmem [#allocation2], %s223
        %p225 = pneg %p43
        %p226 = pneg %p40
        %p227 = pneg %p64
        %p228 = pneg %p61
        %p229 = pneg %p85
        %p230 = pneg %p82
        %p231 = pneg %p106
        %p232 = pneg %p103
        %p233 = pneg %p132
        %p234 = pneg %p129
        %s235 = sand.u32 %s119, 1
        %s236 = scalar_lea.sflag [#allocation4], %s235
        %s237 = sand.u32 %s119, 1
        %s238 = smul.addr %s237, 8
        %s239 = scalar_lea.vmem [#allocation8], %s238
        %v240 = vld [vmem:[%s207] sm:$0xff]
        %v241 = vld [vmem:[#allocation5] sm:$0x7]
        %v243 = vrot.slane %v240, 7
        %vm245 = vcmask 1040384
        %v246 = vsel %vm245, 0.0, %v243
        %v247 = vlaneseq
        %v248 = vshrl.u32 %v247, 7
        %v249 = vsub.s32 0, %v248
        %v250 = vrot.slane %v241, %v249
        %v251 = vmul.f32 %v246, %v250
        %v252 = vadd.f32 %v251, 0.0
        %v253 = vlaneseq
        %v254 = vshrl.u32 %v253, 7
        %v255 = vsub.s32 1, %v254
        %v256 = vrot.slane %v241, %v255
        %v257 = vmul.f32 %v240, %v256
        %v258 = vadd.f32 %v252, %v257
        %v259 = vrot.slane %v240, 1
        %vm261 = vcmask 1046528
        %v262 = vsel %vm261, %v259, 0.0
        %v263 = vlaneseq
        %v264 = vshrl.u32 %v263, 7
        %v265 = vsub.s32 2, %v264
        %v266 = vrot.slane %v241, %v265
        %v267 = vmul.f32 %v262, %v266
        %v268 = vadd.f32 %v258, %v267
        %v269 = vld [vmem:[#allocation7] sm:$0xff]
        %v270 = vld [vmem:[#allocation7 + $0x8] sm:$0xff]
        %v271 = vld [vmem:[#allocation7 + $0x10] sm:$0xff]
        %v272 = vld [vmem:[#allocation7 + $0x18] sm:$0xff]
        %v273 = vld [vmem:[%s3] sm:$0x1]
        %v275 = vlaneseq
        %v276 = vshrl.u32 %v275, 7
        %v277 = vsub.s32 0, %v276
        %v278 = vrot.slane %v273, %v277
        %vm280 = vcmask 261120
        %v282 = vsel %vm280, %v268, 0
        %284 = vmatprep.subr.mxu0 0.0
        %285 = vmatpush1.msra.mxu0 %v269
        %286 = vmatprep.subr.mxu0 0.0
        %287 = vmatpush1.msra.mxu0 %v270
        %288 = vmatprep.subr.mxu0 0.0
        %289 = vmatpush1.msra.mxu0 %v271
        %290 = vmatprep.subr.mxu0 0.0
        %291 = vmatpush1.msra.mxu0 %v272
        %292 = vmatprep.subr.mxu0 0.0
        %293 = vmatpush1.msra.mxu0 0.0
        %294 = vmatprep.subr.mxu0 0.0
        %295 = vmatpush1.msra.mxu0 0.0
        %296 = vmatprep.subr.mxu0 0.0
        %297 = vmatpush1.msra.mxu0 0.0
        %298 = vmatprep.subr.mxu0 0.0
        %299 = vmatpush1.msra.mxu0 0.0
        %300 = vmatprep.subr.mxu0 0.0
        %301 = vmatpush1.msra.mxu0 0.0
        %302 = vmatprep.subr.mxu0 0.0
        %303 = vmatpush1.msra.mxu0 0.0
        %304 = vmatprep.subr.mxu0 0.0
        %305 = vmatpush1.msra.mxu0 0.0
        %306 = vmatprep.subr.mxu0 0.0
        %307 = vmatpush1.msra.mxu0 0.0
        %308 = vmatprep.subr.mxu0 0.0
        %309 = vmatpush1.msra.mxu0 0.0
        %310 = vmatprep.subr.mxu0 0.0
        %311 = vmatpush1.msra.mxu0 0.0
        %312 = vmatprep.subr.mxu0 0.0
        %313 = vmatpush1.msra.mxu0 0.0
        %314 = vmatprep.subr.mxu0 0.0
        %315 = vmatpush1.msra.mxu0 0.0
        %316 = vmatprep.subr.mxu0 0.0
        %317 = vmatpush1.msra.mxu0 0.0
        %318 = vmatprep.subr.mxu0 0.0
        %319 = vmatpush1.msra.mxu0 0.0
        %320 = vmatprep.subr.mxu0 0.0
        %321 = vmatpush1.msra.mxu0 0.0
        %322 = vmatprep.subr.mxu0 0.0
        %323 = vmatpush1.msra.mxu0 0.0
        %324 = vmatprep.subr.mxu0 0.0
        %325 = vmatpush1.msra.mxu0 0.0
        %326 = vmatprep.subr.mxu0 0.0
        %327 = vmatpush1.msra.mxu0 0.0
        %328 = vmatprep.subr.mxu0 0.0
        %329 = vmatpush1.msra.mxu0 0.0
        %330 = vmatprep.subr.mxu0 0.0
        %331 = vmatpush1.msra.mxu0 0.0
        %332 = vmatprep.subr.mxu0 0.0
        %333 = vmatpush1.msra.mxu0 0.0
        %334 = vmatprep.subr.mxu0 0.0
        %335 = vmatpush1.msra.mxu0 0.0
        %336 = vmatprep.subr.mxu0 0.0
        %337 = vmatpush1.msra.mxu0 0.0
        %338 = vmatprep.subr.mxu0 0.0
        %339 = vmatpush1.msra.mxu0 0.0
        %340 = vmatprep.subr.mxu0 0.0
        %341 = vmatpush1.msra.mxu0 0.0
        %342 = vmatprep.subr.mxu0 0.0
        %343 = vmatpush1.msra.mxu0 0.0
        %344 = vmatprep.subr.mxu0 0.0
        %345 = vmatpush1.msra.mxu0 0.0
        %346 = vmatprep.subr.mxu0 0.0
        %347 = vmatpush1.msra.mxu0 0.0
        %348 = vmatprep.mubr.f32.mxu0 0.0
        %349 = vmatmul.mubr.f32.gmra.mrb[0].mxu0 %v282
        %v350 = vpop.f32.mrb[0].mxu0
        %v351 = vadd.f32 %v278, %v350
        %v352 = vpop.f32.mrb[0].mxu0
        %353 = vdwg.mxu0
        %354 = vst.msk [vmem:[%s239] sm:$0xff] %vm280, %v351
        %s355 = sand.u32 %s119, 1
        %s356 = scalar_lea.sflag [#allocation4], %s355
        %s357 = sand.u32 %s119, 1
        %s358 = smul.addr %s357, 8
        %s359 = scalar_lea.vmem [#allocation8], %s358
        // Predicated region
        $region49: #{tpu_custom_call.1} parent=35 // pred_check
          %p360 = pneg %p129
        $region50: #{tpu_custom_call.1} parent=35 // pred_check_branch
          %362 = sbr.rel (%p360) target = $region52
        $region51: #{tpu_custom_call.1} parent=35 // pred_region
          %s364 = ssub.s32 128, 128
          %365 = vsyncadd %s356, %s364
          %s366 = smul.addr %s22, 128
          %s367 = scalar_lea.hbm %s4, %s366
          %s369 = sshll.u32 %s359, 4
          %s370 = int_to_ptr.vmem [resolvable:$true] %s369
          %372 = dma.vmem_to_hbm [thread:$0]  %s370, 128, %s367, %s356
        $region52: #{tpu_custom_call.1} parent=35 // pred_fallthru
          _
      $region36: #{tpu_custom_call.1} parent=5 // pred_fallthru
        _
      %p373 = scmp.le.s32.totalorder 2, %s17
      // Predicated region
      $region53: #{tpu_custom_call.1} parent=5 // pred_check
        %p374 = pneg %p373
      $region54: #{tpu_custom_call.1} parent=5 // pred_check_branch
        %376 = sbr.rel (%p374) target = $region56
      $region55: #{tpu_custom_call.1} parent=5 // pred_region
        %s377 = ssub.s32 %s17, 2
        // Predicated region
        $region57: #{tpu_custom_call.1} parent=55 // pred_check
          %p378 = pneg %p135
        $region58: #{tpu_custom_call.1} parent=55 // pred_check_branch
          %380 = sbr.rel (%p378) target = $region60
        $region59: #{tpu_custom_call.1} parent=55 // pred_region
          %s381 = sand.u32 %s120, 1
          %s382 = scalar_lea.sflag [#allocation4], %s381
          %s383 = sand.u32 %s120, 1
          %s384 = smul.addr %s383, 8
          %s385 = scalar_lea.vmem [#allocation8], %s384
          %386 = dma.done %s382, 128
        $region60: #{tpu_custom_call.1} parent=55 // pred_fallthru
          _
      $region56: #{tpu_custom_call.1} parent=5 // pred_fallthru
        _
    $region6: #{tpu_custom_call.1} parent=1 // loop_footer
      %s21 = sadd.s32 1, %s17
    $region7: #{tpu_custom_call.1} parent=1 // loop_footer_branch
      %16 = sbr.rel target = $region3
    $region8: #{tpu_custom_call.1} parent=1 // loop_exit
      _
    %387 = vsyncpa [#allocation3], 1
    %s388 = scalar_lea.sflag [#allocation3], 1
    %389 = vsyncpa %s388, 1
    %390 = vsyncpa [#allocation6], 1
    %391 = vsyncpa [#allocation4], 1
    %s392 = scalar_lea.sflag [#allocation4], 1
    %393 = vsyncpa %s392, 1

</llo_original>
